<compile_context>
chip_gen: v7x
topology: tpu7x:2x2x1
jax: 0.10.0
libtpu: 0.0.40
codegen_flags: <defaults>
</compile_context>

<pallas_src>
import functools

import jax
import jax.numpy as jnp
import numpy as np
from jax.experimental import pallas as pl
from jax.experimental.pallas import tpu as pltpu


def _conv_relu_kernel(x_ref, w_ref, b_ref, rc_ref, o_ref, xcol_ref, *,
                      taps, img_h, img_w, n_in, bblk):
    """Fused 'same' conv + bias + ReLU, lane-dense, im2col-on-input.

    x_ref:    (bblk, Cin, HWp)   images, flattened spatial on lanes (f32)
    w_ref:    (Cout, K*K*Cin)    tap-stacked weights (bf16)
    b_ref:    (Cout, 1)          bias (f32)
    rc_ref:   (2, HWp)           row / col index planes (int32)
    o_ref:    (bblk, Cout, HWp)  outputs (input dtype)
    xcol_ref: (K*K*Cin, HWp)     f32 VMEM scratch holding the im2col operand
    """
    hwp = x_ref.shape[2]
    row_plane = rc_ref[0:1, :]                     # (1, HWp) int32
    col_plane = rc_ref[1:2, :]                     # (1, HWp) int32
    wmat = w_ref[...]                              # (Cout, K*K*Cin) bf16
    bias = b_ref[...]                              # (Cout, 1) f32

    # Per-tap 'same'-padding validity from the coordinate planes: a couple of
    # VPU compares per tap, hoisted out of the image loop.  Replaces the
    # (K*K, HWp) f32 mask operand of v1.  `None` == always-valid (center tap).
    tap_masks = []
    for dh, dw, _ in taps:
        valid = None
        if dh < 0:
            valid = row_plane >= (-dh)
        elif dh > 0:
            valid = row_plane < (img_h - dh)
        if dw < 0:
            c = col_plane >= (-dw)
            valid = c if valid is None else (valid & c)
        elif dw > 0:
            c = col_plane < (img_w - dw)
            valid = c if valid is None else (valid & c)
        tap_masks.append(valid)

    for img in range(bblk):                        # static unroll over images
        x = x_ref[img]                             # (Cin, HWp) f32
        for t, ((dh, dw, s), valid) in enumerate(zip(taps, tap_masks)):
            xt = x
            if s % hwp != 0:
                # out[:, p] needs x[:, p + s]; circular-wrap positions are
                # exactly the mask-invalid ones, so the wrap never leaks.
                xt = pltpu.roll(x, shift=(-s) % hwp, axis=1)   # XLU rotate
            if valid is not None:
                xt = jnp.where(valid, xt, 0.0)
            # TODO(synk): a bf16 xcol scratch would halve this buffer again;
            # kept f32 so the Cin-row tap slabs stay sublane-store friendly.
            xcol_ref[t * n_in:(t + 1) * n_in, :] = xt

        # One deep-contraction MXU matmul per image (contraction K*K*Cin
        # instead of Cin): the K*K tap accumulation now happens in the MXU.
        acc = jax.lax.dot_general(
            wmat, xcol_ref[...].astype(jnp.bfloat16),
            dimension_numbers=(((1,), (0,)), ((), ())),
            preferred_element_type=jnp.float32)     # (Cout, HWp) f32
        acc = acc + bias                            # bias epilogue (f32)
        o_ref[img] = jnp.maximum(acc, 0.0).astype(o_ref.dtype)   # ReLU


def _pick_batch_block(batch):
    """Images per grid step: amortize the per-step fixed cost, but keep
    >= 2 parallel grid steps when possible so both v7x TensorCores get work."""
    for bblk in range(min(8, batch), 0, -1):
        if batch % bblk == 0 and batch // bblk >= 2:
            return bblk
    return 1


def conv_same_relu(x_nchw, weight_oihw, bias):
    """Conv2d(padding='same', stride=1) + ReLU on a single NCHW feature map."""
    # TODO(synk): stride > 1 and explicit integer padding not implemented
    # (module defaults are padding='same', stride=1).
    B, Cin, H, W = x_nchw.shape
    Cout, _, K, _ = weight_oihw.shape
    HW = H * W
    pad_lo = (K - 1) // 2

    # Flattened-spatial length rounded up to whole 128-lane vregs: output
    # stores stay unmasked and the lane rolls act on whole vregs.
    HWp = ((HW + 127) // 128) * 128

    # NCHW -> (B, Cin, H*W) is a free reshape (no transpose, no halo pad).
    xf = x_nchw.reshape(B, Cin, HW)
    if HWp != HW:
        # TODO(synk): for production maps whose H*W is not 128-aligned, tile
        # HW into 128-lane chunks with a bounded tail chunk instead of paying
        # this extra wrapper-side HBM pass.
        xf = jnp.pad(xf, ((0, 0), (0, 0), (0, HWp - HW)))

    # Tap-stacked weights (Cout, K*K*Cin): column (kh*K + kw)*Cin + c holds
    # weight[:, c, kh, kw].  bf16 feeds the MXU natively; accumulation is f32.
    w2 = jnp.transpose(weight_oihw, (0, 2, 3, 1)).reshape(Cout, K * K * Cin)
    w2 = w2.astype(jnp.bfloat16)
    b2 = bias.reshape(Cout, 1).astype(jnp.float32)

    # Static tap offsets + a single (2, HWp) int32 row/col coordinate plane
    # (pure numpy at trace time) from which the kernel derives the per-tap
    # 'same'-padding validity masks.
    taps = tuple((kh - pad_lo, kw - pad_lo, (kh - pad_lo) * W + (kw - pad_lo))
                 for kh in range(K) for kw in range(K))
    ii, jj = np.meshgrid(np.arange(H), np.arange(W), indexing="ij")
    rc = np.zeros((2, HWp), np.int32)
    rc[0, :HW] = ii.reshape(-1)
    rc[1, :HW] = jj.reshape(-1)
    rc = jnp.asarray(rc)

    bblk = _pick_batch_block(B)
    grid = (B // bblk,)
    kernel = functools.partial(_conv_relu_kernel, taps=taps, img_h=H,
                               img_w=W, n_in=Cin, bblk=bblk)

    # TODO(synk): for production-size feature maps add an HW-chunk grid axis
    # (halo handled by the same roll/mask scheme) so per-step VMEM stays well
    # inside v7x's 64 MiB and both TCs stay busy even at B == 1; at those
    # sizes each matmul is already >= 512 lanes wide, so no B-folding needed.
    out = pl.pallas_call(
        kernel,
        out_shape=jax.ShapeDtypeStruct((B, Cout, HWp), x_nchw.dtype),
        grid_spec=pltpu.PrefetchScalarGridSpec(
            num_scalar_prefetch=0,
            grid=grid,
            in_specs=[
                pl.BlockSpec((bblk, Cin, HWp), lambda gi: (gi, 0, 0)),
                # Constant operands (block index never changes).
                # TODO(synk): mark these pipeline_mode=pl.Buffered(1) to drop
                # the redundant second buffer; a few KiB at these sizes.
                pl.BlockSpec((Cout, K * K * Cin), lambda gi: (0, 0)),
                pl.BlockSpec((Cout, 1), lambda gi: (0, 0)),
                pl.BlockSpec((2, HWp), lambda gi: (0, 0)),
            ],
            out_specs=pl.BlockSpec((bblk, Cout, HWp), lambda gi: (gi, 0, 0)),
            scratch_shapes=[pltpu.VMEM((K * K * Cin, HWp), jnp.float32)],
        ),
        compiler_params=pltpu.CompilerParams(
            dimension_semantics=("parallel",),
            # v7x has 64 MiB physical VMEM (128 MiB on v5e/v6e); blocks here
            # are sized far below that, the explicit limit just keeps the
            # scoped default from constraining larger maps.
            vmem_limit_bytes=64 * 1024 * 1024),
    )(xf, w2, b2, rc)

    # Lanes [HW, HWp) hold ReLU(bias + junk); they are dropped here.  Never
    # consume the raw (B, Cout, HWp) buffer directly.
    return out[:, :, :HW].reshape(B, Cout, H, W)


class ConvPallas:
    """Mirrors rslearn Conv: same conv+ReLU applied to each feature map."""

    def __init__(self, in_channels, out_channels, kernel_size, key):
        k_w, k_b = jax.random.split(key)
        fan_in = in_channels * kernel_size * kernel_size
        bound = 1.0 / (fan_in ** 0.5)
        # Deterministic synthetic init (uniform, like torch Conv2d's bound).
        self.weight = jax.random.uniform(
            k_w, (out_channels, in_channels, kernel_size, kernel_size),
            minval=-bound, maxval=bound, dtype=jnp.float32)
        self.bias = jax.random.uniform(
            k_b, (out_channels,), minval=-bound, maxval=bound,
            dtype=jnp.float32)

    def __call__(self, features, inputs=None):
        # TODO(synk): feature maps have different spatial sizes, so each gets
        # its own pallas_call; a single ragged batched call is not implemented.
        return [conv_same_relu(f, self.weight, self.bias) for f in features]


def _reference(features, weight, bias):
    """Pure-JAX reference (lax.conv) for a correctness check."""
    outs = []
    for x in features:
        y = jax.lax.conv_general_dilated(
            x, weight, window_strides=(1, 1), padding="SAME",
            dimension_numbers=("NCHW", "OIHW", "NCHW"))
        y = y + bias[None, :, None, None]
        outs.append(jnp.maximum(y, 0.0))
    return outs


if __name__ == "__main__":
    key = jax.random.PRNGKey(0)
    k_mod, k1, k2 = jax.random.split(key, 3)

    in_channels, out_channels, kernel_size = 4, 8, 3
    module = ConvPallas(in_channels, out_channels, kernel_size, k_mod)

    # Multi-scale feature maps (as in the PyTorch module's list input).
    feat_hi = jax.random.normal(k1, (2, in_channels, 16, 16), jnp.float32)
    feat_lo = jax.random.normal(k2, (2, in_channels, 8, 8), jnp.float32)
    features = [feat_hi, feat_lo]

    outs = module(features)
    outs = [jax.block_until_ready(o) for o in outs]

    refs = _reference(features, module.weight, module.bias)
    for o, r in zip(outs, refs):
        assert o.shape == r.shape, (o.shape, r.shape)
        # bf16 MXU operands (f32 accumulation) -> looser tol than pure f32.
        err = float(jnp.max(jnp.abs(o - r)))
        assert err < 5e-2, err

    print("KERNEL_OK")
</pallas_src>

<mosaic_0001>
module attributes {stable_mosaic.version = 11 : i64} {
  func.func @_conv_relu_kernel(%arg0: i32, %arg1: memref<1x4x256xf32, #tpu.memory_space<vmem>>, %arg2: memref<8x36xbf16, #tpu.memory_space<vmem>>, %arg3: memref<8x1xf32, #tpu.memory_space<vmem>>, %arg4: memref<2x256xi32, #tpu.memory_space<vmem>>, %arg5: memref<1x8x256xf32, #tpu.memory_space<vmem>>, %arg6: memref<36x256xf32, #tpu.memory_space<vmem>>) attributes {dimension_semantics = [#tpu.dimension_semantics<parallel>], iteration_bounds = array<i64: 2>, scalar_prefetch = 0 : i64, scratch_operands = 1 : i64, tpu.core_type = #tpu.core_type<tc>, window_params = [{transform_indices = @transform_0, window_bounds = array<i64: 1, 4, 256>}, {pipeline_mode = #tpu.pipeline_mode<synchronous>, transform_indices = @transform_1, window_bounds = array<i64: 8, 36>}, {pipeline_mode = #tpu.pipeline_mode<synchronous>, transform_indices = @transform_2, window_bounds = array<i64: 8, 1>}, {pipeline_mode = #tpu.pipeline_mode<synchronous>, transform_indices = @transform_3, window_bounds = array<i64: 2, 256>}, {transform_indices = @transform_4, window_bounds = array<i64: 1, 8, 256>}]} {
    %c0 = arith.constant 0 : index
    %c0_0 = arith.constant 0 : index
    %0 = vector.load %arg4[%c0, %c0_0] : memref<2x256xi32, #tpu.memory_space<vmem>>, vector<1x256xi32>
    %c1 = arith.constant 1 : index
    %c0_1 = arith.constant 0 : index
    %1 = vector.load %arg4[%c1, %c0_1] : memref<2x256xi32, #tpu.memory_space<vmem>>, vector<1x256xi32>
    %c0_2 = arith.constant 0 : index
    %c0_3 = arith.constant 0 : index
    %2 = vector.load %arg2[%c0_2, %c0_3] : memref<8x36xbf16, #tpu.memory_space<vmem>>, vector<8x36xbf16>
    %c0_4 = arith.constant 0 : index
    %c0_5 = arith.constant 0 : index
    %3 = vector.load %arg3[%c0_4, %c0_5] : memref<8x1xf32, #tpu.memory_space<vmem>>, vector<8x1xf32>
    %c1_i32 = arith.constant 1 : i32
    %4 = vector.broadcast %c1_i32 : i32 to vector<1x256xi32>
    %5 = arith.cmpi sge, %0, %4 : vector<1x256xi32>
    %c1_i32_6 = arith.constant 1 : i32
    %6 = vector.broadcast %c1_i32_6 : i32 to vector<1x256xi32>
    %7 = arith.cmpi sge, %1, %6 : vector<1x256xi32>
    %8 = arith.andi %5, %7 : vector<1x256xi1>
    %c1_i32_7 = arith.constant 1 : i32
    %9 = vector.broadcast %c1_i32_7 : i32 to vector<1x256xi32>
    %10 = arith.cmpi sge, %0, %9 : vector<1x256xi32>
    %c1_i32_8 = arith.constant 1 : i32
    %11 = vector.broadcast %c1_i32_8 : i32 to vector<1x256xi32>
    %12 = arith.cmpi sge, %0, %11 : vector<1x256xi32>
    %c15_i32 = arith.constant 15 : i32
    %13 = vector.broadcast %c15_i32 : i32 to vector<1x256xi32>
    %14 = arith.cmpi slt, %1, %13 : vector<1x256xi32>
    %15 = arith.andi %12, %14 : vector<1x256xi1>
    %c1_i32_9 = arith.constant 1 : i32
    %16 = vector.broadcast %c1_i32_9 : i32 to vector<1x256xi32>
    %17 = arith.cmpi sge, %1, %16 : vector<1x256xi32>
    %c15_i32_10 = arith.constant 15 : i32
    %18 = vector.broadcast %c15_i32_10 : i32 to vector<1x256xi32>
    %19 = arith.cmpi slt, %1, %18 : vector<1x256xi32>
    %c15_i32_11 = arith.constant 15 : i32
    %20 = vector.broadcast %c15_i32_11 : i32 to vector<1x256xi32>
    %21 = arith.cmpi slt, %0, %20 : vector<1x256xi32>
    %c1_i32_12 = arith.constant 1 : i32
    %22 = vector.broadcast %c1_i32_12 : i32 to vector<1x256xi32>
    %23 = arith.cmpi sge, %1, %22 : vector<1x256xi32>
    %24 = arith.andi %21, %23 : vector<1x256xi1>
    %c15_i32_13 = arith.constant 15 : i32
    %25 = vector.broadcast %c15_i32_13 : i32 to vector<1x256xi32>
    %26 = arith.cmpi slt, %0, %25 : vector<1x256xi32>
    %c15_i32_14 = arith.constant 15 : i32
    %27 = vector.broadcast %c15_i32_14 : i32 to vector<1x256xi32>
    %28 = arith.cmpi slt, %0, %27 : vector<1x256xi32>
    %c15_i32_15 = arith.constant 15 : i32
    %29 = vector.broadcast %c15_i32_15 : i32 to vector<1x256xi32>
    %30 = arith.cmpi slt, %1, %29 : vector<1x256xi32>
    %31 = arith.andi %28, %30 : vector<1x256xi1>
    %c0_16 = arith.constant 0 : index
    %c0_17 = arith.constant 0 : index
    %c0_18 = arith.constant 0 : index
    %32 = vector.load %arg1[%c0_16, %c0_17, %c0_18] : memref<1x4x256xf32, #tpu.memory_space<vmem>>, vector<1x4x256xf32>
    %33 = vector.shape_cast %32 : vector<1x4x256xf32> to vector<4x256xf32>
    %c17_i32 = arith.constant 17 : i32
    %34 = tpu.dynamic_rotate %33 by %c17_i32 dim 1 : vector<4x256xf32>, i32 -> vector<4x256xf32>
    %cst = arith.constant 0.000000e+00 : f32
    %35 = vector.shape_cast %8 : vector<1x256xi1> to vector<1x256xi1>
    %36 = vector.broadcast %35 : vector<1x256xi1> to vector<4x256xi1>
    %37 = vector.broadcast %cst : f32 to vector<4x256xf32>
    %38 = arith.select %36, %34, %37 : vector<4x256xi1>, vector<4x256xf32>
    %c0_19 = arith.constant 0 : index
    %c0_20 = arith.constant 0 : index
    %39 = vector.load %arg6[%c0_19, %c0_20] : memref<36x256xf32, #tpu.memory_space<vmem>>, vector<4x256xf32>
    tpu.vector_store %arg6[%c0_19, %c0_20], %38 {strides = array<i32>} : memref<36x256xf32, #tpu.memory_space<vmem>>, vector<4x256xf32>,
    %c16_i32 = arith.constant 16 : i32
    %40 = tpu.dynamic_rotate %33 by %c16_i32 dim 1 : vector<4x256xf32>, i32 -> vector<4x256xf32>
    %cst_21 = arith.constant 0.000000e+00 : f32
    %41 = vector.shape_cast %10 : vector<1x256xi1> to vector<1x256xi1>
    %42 = vector.broadcast %41 : vector<1x256xi1> to vector<4x256xi1>
    %43 = vector.broadcast %cst_21 : f32 to vector<4x256xf32>
    %44 = arith.select %42, %40, %43 : vector<4x256xi1>, vector<4x256xf32>
    %c4 = arith.constant 4 : index
    %c0_22 = arith.constant 0 : index
    %45 = vector.load %arg6[%c4, %c0_22] : memref<36x256xf32, #tpu.memory_space<vmem>>, vector<4x256xf32>
    tpu.vector_store %arg6[%c4, %c0_22], %44 {strides = array<i32>} : memref<36x256xf32, #tpu.memory_space<vmem>>, vector<4x256xf32>,
    %c15_i32_23 = arith.constant 15 : i32
    %46 = tpu.dynamic_rotate %33 by %c15_i32_23 dim 1 : vector<4x256xf32>, i32 -> vector<4x256xf32>
    %cst_24 = arith.constant 0.000000e+00 : f32
    %47 = vector.shape_cast %15 : vector<1x256xi1> to vector<1x256xi1>
    %48 = vector.broadcast %47 : vector<1x256xi1> to vector<4x256xi1>
    %49 = vector.broadcast %cst_24 : f32 to vector<4x256xf32>
    %50 = arith.select %48, %46, %49 : vector<4x256xi1>, vector<4x256xf32>
    %c8 = arith.constant 8 : index
    %c0_25 = arith.constant 0 : index
    %51 = vector.load %arg6[%c8, %c0_25] : memref<36x256xf32, #tpu.memory_space<vmem>>, vector<4x256xf32>
    tpu.vector_store %arg6[%c8, %c0_25], %50 {strides = array<i32>} : memref<36x256xf32, #tpu.memory_space<vmem>>, vector<4x256xf32>,
    %c1_i32_26 = arith.constant 1 : i32
    %52 = tpu.dynamic_rotate %33 by %c1_i32_26 dim 1 : vector<4x256xf32>, i32 -> vector<4x256xf32>
    %cst_27 = arith.constant 0.000000e+00 : f32
    %53 = vector.shape_cast %17 : vector<1x256xi1> to vector<1x256xi1>
    %54 = vector.broadcast %53 : vector<1x256xi1> to vector<4x256xi1>
    %55 = vector.broadcast %cst_27 : f32 to vector<4x256xf32>
    %56 = arith.select %54, %52, %55 : vector<4x256xi1>, vector<4x256xf32>
    %c12 = arith.constant 12 : index
    %c0_28 = arith.constant 0 : index
    %57 = vector.load %arg6[%c12, %c0_28] : memref<36x256xf32, #tpu.memory_space<vmem>>, vector<4x256xf32>
    tpu.vector_store %arg6[%c12, %c0_28], %56 {strides = array<i32>} : memref<36x256xf32, #tpu.memory_space<vmem>>, vector<4x256xf32>,
    %c16 = arith.constant 16 : index
    %c0_29 = arith.constant 0 : index
    %58 = vector.load %arg6[%c16, %c0_29] : memref<36x256xf32, #tpu.memory_space<vmem>>, vector<4x256xf32>
    tpu.vector_store %arg6[%c16, %c0_29], %33 {strides = array<i32>} : memref<36x256xf32, #tpu.memory_space<vmem>>, vector<4x256xf32>,
    %c255_i32 = arith.constant 255 : i32
    %59 = tpu.dynamic_rotate %33 by %c255_i32 dim 1 : vector<4x256xf32>, i32 -> vector<4x256xf32>
    %cst_30 = arith.constant 0.000000e+00 : f32
    %60 = vector.shape_cast %19 : vector<1x256xi1> to vector<1x256xi1>
    %61 = vector.broadcast %60 : vector<1x256xi1> to vector<4x256xi1>
    %62 = vector.broadcast %cst_30 : f32 to vector<4x256xf32>
    %63 = arith.select %61, %59, %62 : vector<4x256xi1>, vector<4x256xf32>
    %c20 = arith.constant 20 : index
    %c0_31 = arith.constant 0 : index
    %64 = vector.load %arg6[%c20, %c0_31] : memref<36x256xf32, #tpu.memory_space<vmem>>, vector<4x256xf32>
    tpu.vector_store %arg6[%c20, %c0_31], %63 {strides = array<i32>} : memref<36x256xf32, #tpu.memory_space<vmem>>, vector<4x256xf32>,
    %c241_i32 = arith.constant 241 : i32
    %65 = tpu.dynamic_rotate %33 by %c241_i32 dim 1 : vector<4x256xf32>, i32 -> vector<4x256xf32>
    %cst_32 = arith.constant 0.000000e+00 : f32
    %66 = vector.shape_cast %24 : vector<1x256xi1> to vector<1x256xi1>
    %67 = vector.broadcast %66 : vector<1x256xi1> to vector<4x256xi1>
    %68 = vector.broadcast %cst_32 : f32 to vector<4x256xf32>
    %69 = arith.select %67, %65, %68 : vector<4x256xi1>, vector<4x256xf32>
    %c24 = arith.constant 24 : index
    %c0_33 = arith.constant 0 : index
    %70 = vector.load %arg6[%c24, %c0_33] : memref<36x256xf32, #tpu.memory_space<vmem>>, vector<4x256xf32>
    tpu.vector_store %arg6[%c24, %c0_33], %69 {strides = array<i32>} : memref<36x256xf32, #tpu.memory_space<vmem>>, vector<4x256xf32>,
    %c240_i32 = arith.constant 240 : i32
    %71 = tpu.dynamic_rotate %33 by %c240_i32 dim 1 : vector<4x256xf32>, i32 -> vector<4x256xf32>
    %cst_34 = arith.constant 0.000000e+00 : f32
    %72 = vector.shape_cast %26 : vector<1x256xi1> to vector<1x256xi1>
    %73 = vector.broadcast %72 : vector<1x256xi1> to vector<4x256xi1>
    %74 = vector.broadcast %cst_34 : f32 to vector<4x256xf32>
    %75 = arith.select %73, %71, %74 : vector<4x256xi1>, vector<4x256xf32>
    %c28 = arith.constant 28 : index
    %c0_35 = arith.constant 0 : index
    %76 = vector.load %arg6[%c28, %c0_35] : memref<36x256xf32, #tpu.memory_space<vmem>>, vector<4x256xf32>
    tpu.vector_store %arg6[%c28, %c0_35], %75 {strides = array<i32>} : memref<36x256xf32, #tpu.memory_space<vmem>>, vector<4x256xf32>,
    %c239_i32 = arith.constant 239 : i32
    %77 = tpu.dynamic_rotate %33 by %c239_i32 dim 1 : vector<4x256xf32>, i32 -> vector<4x256xf32>
    %cst_36 = arith.constant 0.000000e+00 : f32
    %78 = vector.shape_cast %31 : vector<1x256xi1> to vector<1x256xi1>
    %79 = vector.broadcast %78 : vector<1x256xi1> to vector<4x256xi1>
    %80 = vector.broadcast %cst_36 : f32 to vector<4x256xf32>
    %81 = arith.select %79, %77, %80 : vector<4x256xi1>, vector<4x256xf32>
    %c32 = arith.constant 32 : index
    %c0_37 = arith.constant 0 : index
    %82 = vector.load %arg6[%c32, %c0_37] : memref<36x256xf32, #tpu.memory_space<vmem>>, vector<4x256xf32>
    tpu.vector_store %arg6[%c32, %c0_37], %81 {strides = array<i32>} : memref<36x256xf32, #tpu.memory_space<vmem>>, vector<4x256xf32>,
    %c0_38 = arith.constant 0 : index
    %c0_39 = arith.constant 0 : index
    %83 = vector.load %arg6[%c0_38, %c0_39] : memref<36x256xf32, #tpu.memory_space<vmem>>, vector<36x256xf32>
    %84 = arith.truncf %83 : vector<36x256xf32> to vector<36x256xbf16>
    %cst_40 = arith.constant dense<0.000000e+00> : vector<8x256xf32>
    %85 = tpu.matmul %2, %84, %cst_40 {dimension_numbers = #tpu.dot_dimension_numbers<[1], [0], [0], [1], [0, 0, 1, 1], [], []>} : vector<8x36xbf16>, vector<36x256xbf16>, vector<8x256xf32> -> vector<8x256xf32>
    %86 = vector.broadcast %3 : vector<8x1xf32> to vector<8x256xf32>
    %87 = arith.addf %85, %86 : vector<8x256xf32>
    %cst_41 = arith.constant 0.000000e+00 : f32
    %88 = vector.broadcast %cst_41 : f32 to vector<8x256xf32>
    %89 = arith.maximumf %87, %88 : vector<8x256xf32>
    %c0_42 = arith.constant 0 : index
    %c0_43 = arith.constant 0 : index
    %c0_44 = arith.constant 0 : index
    %90 = vector.load %arg5[%c0_42, %c0_43, %c0_44] : memref<1x8x256xf32, #tpu.memory_space<vmem>>, vector<1x8x256xf32>
    %91 = vector.shape_cast %90 : vector<1x8x256xf32> to vector<8x256xf32>
    %92 = vector.shape_cast %89 : vector<8x256xf32> to vector<1x8x256xf32>
    tpu.vector_store %arg5[%c0_42, %c0_43, %c0_44], %92 {strides = array<i32>} : memref<1x8x256xf32, #tpu.memory_space<vmem>>, vector<1x8x256xf32>,
    return
  }
  func.func @transform_0(%arg0: i32) -> (i32, i32, i32) {
    %c0_i32 = arith.constant 0 : i32
    %c0_i32_0 = arith.constant 0 : i32
    %c0_i32_1 = arith.constant 0 : i32
    return %arg0, %c0_i32, %c0_i32_0 : i32, i32, i32
  }
  func.func @transform_1(%arg0: i32) -> (i32, i32) {
    %c0_i32 = arith.constant 0 : i32
    %c0_i32_0 = arith.constant 0 : i32
    %c0_i32_1 = arith.constant 0 : i32
    return %c0_i32, %c0_i32_0 : i32, i32
  }
  func.func @transform_2(%arg0: i32) -> (i32, i32) {
    %c0_i32 = arith.constant 0 : i32
    %c0_i32_0 = arith.constant 0 : i32
    %c0_i32_1 = arith.constant 0 : i32
    return %c0_i32, %c0_i32_0 : i32, i32
  }
  func.func @transform_3(%arg0: i32) -> (i32, i32) {
    %c0_i32 = arith.constant 0 : i32
    %c0_i32_0 = arith.constant 0 : i32
    %c0_i32_1 = arith.constant 0 : i32
    return %c0_i32, %c0_i32_0 : i32, i32
  }
  func.func @transform_4(%arg0: i32) -> (i32, i32, i32) {
    %c0_i32 = arith.constant 0 : i32
    %c0_i32_0 = arith.constant 0 : i32
    %c0_i32_1 = arith.constant 0 : i32
    return %arg0, %c0_i32, %c0_i32_0 : i32, i32, i32
  }
}

</mosaic_0001>

<llo_original>
// kernel: tpu_custom_call.1
$region0: #{tpu_custom_call.1}
  #allocation0 [shape = 'u32[]', space=smem, size = 0x4, offset = 0x4, fixed_abs, tag = 'smem constant byte address 0x4 - core index']
  #allocation1 [shape = 'u32[144,128]{1,0:T(1,128)}', space=vmem, size = 0x12000, scoped, tag = 'internal scratch']
  #allocation2 [shape = 'f32[36,256]{1,0:T(8,128)}', space=vmem, size = 0xa000, scoped, tag = 'scratch operand']
  %s0 = inlined_call_operand.hbm [shape: f32[2,4,256], index: 0, kind: input, shape index: {}]
  %s1 = inlined_call_operand.hbm [shape: bf16[8,36], index: 1, kind: input, shape index: {}]
  %s2 = inlined_call_operand.hbm [shape: f32[8,1], index: 2, kind: input, shape index: {}]
  %s3 = inlined_call_operand.hbm [shape: s32[2,256], index: 3, kind: input, shape index: {}]
  %s4 = inlined_call_operand.hbm [shape: f32[2,8,256], index: 4, kind: output, shape index: {}]
  %s5 = sld [smem:[#allocation0]]
  $region65: #{tpu_custom_call.1} parent=0
    _
  %s7 = ssub.s32 1, %s5
  %s8 = scalar_select 0, %s7, %s5
  $region1: #{tpu_custom_call.1} parent=0
    #allocation3 [shape = 'u8[8192]{0}', space=vmem, size = 0x2000, scoped, tag = 'input window, operand 0']
    #allocation4 [shape = 's32[2]{0}', space=sflag, size = 0x8, scoped, tag = 'scoped memory for tpu_custom_call.1']
    #allocation5 [shape = 's32[2]{0}', space=sflag, size = 0x8, scoped, tag = 'scoped memory for tpu_custom_call.1']
    #allocation6 [shape = 'u8[2048]{0}', space=vmem, size = 0x800, scoped, tag = 'input window, operand 1, single buffered']
    #allocation7 [shape = 's32[1]{0}', space=sflag, size = 0x4, scoped, tag = 'scoped memory for tpu_custom_call.1']
    #allocation8 [shape = 'u8[4096]{0}', space=vmem, size = 0x1000, scoped, tag = 'input window, operand 2, single buffered']
    #allocation9 [shape = 'u8[2048]{0}', space=vmem, size = 0x800, scoped, tag = 'input window, operand 3, single buffered']
    #allocation10 [shape = 's32[1]{0}', space=sflag, size = 0x4, scoped, tag = 'scoped memory for tpu_custom_call.1']
    #allocation11 [shape = 'u8[16384]{0}', space=vmem, size = 0x4000, scoped, tag = 'output window, operand 0']
    %9 = vsyncpa [#allocation4], 0
    %s10 = scalar_lea.sflag [#allocation4], 1
    %11 = vsyncpa %s10, 0
    %12 = vsyncpa [#allocation7], 0
    %13 = vsyncpa [#allocation10], 0
    %14 = vsyncpa [#allocation5], 0
    %s15 = scalar_lea.sflag [#allocation5], 1
    %16 = vsyncpa %s15, 0
    loop: start=0, step=1, limit=4
    $region2: #{tpu_custom_call.1} parent=1 // loop_pre_header
      _
    $region3: #{tpu_custom_call.1} parent=1 // loop_header
      %s18 = sphi 0, %s22
      %p19 = scmp.ge.s32.totalorder %s18, 4
      %s28 = sphi 0, %s30
      %s31 = sphi 0, %s28
      %s32 = sphi 0, %s31
      %s48 = sphi 0, %s32
      %s52 = sphi 0, %s52
      %s54 = sphi 0, %s52
      %s55 = sphi 0, %s54
      %s69 = sphi 0, %s55
      %s73 = sphi 0, %s73
      %s75 = sphi 0, %s73
      %s76 = sphi 0, %s75
      %s90 = sphi 0, %s76
      %s94 = sphi 0, %s94
      %s96 = sphi 0, %s94
      %s97 = sphi 0, %s96
      %s111 = sphi 0, %s97
      %s117 = sphi 0, %s119
      %s120 = sphi 0, %s117
      %s121 = sphi 0, %s120
      %s137 = sphi 0, %s121
    $region4: #{tpu_custom_call.1} parent=1 // loop_header_branch
      %21 = sbr.rel (%p19) target = $region8
    $region5: #{tpu_custom_call.1} parent=1 // loop_body
      %s23 = ssub.s32 %s18, 1
      %s24 = ssub.s32 %s18, 2
      %s25 = sadd.s32 %s18, 1
      %s26 = ssub.s32 %s18, %s25
      %p27 = scmp.eq.s32.totalorder %s26, 0
      %s29 = sadd.s32 %s28, 1
      %s30 = scalar_select %p27, %s28, %s29
      %p33 = pneg %p27
      %p34 = scmp.eq.s32.totalorder %s18, 1
      %p35 = por %p33, %p34
      %p36 = scmp.ne.s32.totalorder %s28, %s31
      %p37 = scmp.eq.s32.totalorder %s18, 0
      %p38 = por %p36, %p37
      %p39 = scmp.ne.s32.totalorder %s28, %s31
      %p40 = scmp.eq.s32.totalorder %s23, 1
      %p41 = por %p39, %p40
      %p42 = scmp.ne.s32.totalorder %s31, %s32
      %p43 = scmp.eq.s32.totalorder %s23, 0
      %p44 = por %p42, %p43
      %p45 = scmp.ne.s32.totalorder %s31, %s32
      %p46 = scmp.eq.s32.totalorder %s24, 1
      %p47 = por %p45, %p46
      %p49 = scmp.ne.s32.totalorder %s32, %s48
      %p50 = scmp.eq.s32.totalorder %s24, 0
      %p51 = por %p49, %p50
      %s53 = sadd.s32 %s52, 1
      %p56 = scmp.eq.s32.totalorder %s18, 1
      %p57 = scmp.ne.s32.totalorder %s52, %s54
      %p58 = scmp.eq.s32.totalorder %s18, 0
      %p59 = por %p57, %p58
      %p60 = scmp.ne.s32.totalorder %s52, %s54
      %p61 = scmp.eq.s32.totalorder %s23, 1
      %p62 = por %p60, %p61
      %p63 = scmp.ne.s32.totalorder %s54, %s55
      %p64 = scmp.eq.s32.totalorder %s23, 0
      %p65 = por %p63, %p64
      %p66 = scmp.ne.s32.totalorder %s54, %s55
      %p67 = scmp.eq.s32.totalorder %s24, 1
      %p68 = por %p66, %p67
      %p70 = scmp.ne.s32.totalorder %s55, %s69
      %p71 = scmp.eq.s32.totalorder %s24, 0
      %p72 = por %p70, %p71
      %s74 = sadd.s32 %s73, 1
      %p77 = scmp.eq.s32.totalorder %s18, 1
      %p78 = scmp.ne.s32.totalorder %s73, %s75
      %p79 = scmp.eq.s32.totalorder %s18, 0
      %p80 = por %p78, %p79
      %p81 = scmp.ne.s32.totalorder %s73, %s75
      %p82 = scmp.eq.s32.totalorder %s23, 1
      %p83 = por %p81, %p82
      %p84 = scmp.ne.s32.totalorder %s75, %s76
      %p85 = scmp.eq.s32.totalorder %s23, 0
      %p86 = por %p84, %p85
      %p87 = scmp.ne.s32.totalorder %s75, %s76
      %p88 = scmp.eq.s32.totalorder %s24, 1
      %p89 = por %p87, %p88
      %p91 = scmp.ne.s32.totalorder %s76, %s90
      %p92 = scmp.eq.s32.totalorder %s24, 0
      %p93 = por %p91, %p92
      %s95 = sadd.s32 %s94, 1
      %p98 = scmp.eq.s32.totalorder %s18, 1
      %p99 = scmp.ne.s32.totalorder %s94, %s96
      %p100 = scmp.eq.s32.totalorder %s18, 0
      %p101 = por %p99, %p100
      %p102 = scmp.ne.s32.totalorder %s94, %s96
      %p103 = scmp.eq.s32.totalorder %s23, 1
      %p104 = por %p102, %p103
      %p105 = scmp.ne.s32.totalorder %s96, %s97
      %p106 = scmp.eq.s32.totalorder %s23, 0
      %p107 = por %p105, %p106
      %p108 = scmp.ne.s32.totalorder %s96, %s97
      %p109 = scmp.eq.s32.totalorder %s24, 1
      %p110 = por %p108, %p109
      %p112 = scmp.ne.s32.totalorder %s97, %s111
      %p113 = scmp.eq.s32.totalorder %s24, 0
      %p114 = por %p112, %p113
      %s115 = ssub.s32 %s18, %s25
      %p116 = scmp.eq.s32.totalorder %s115, 0
      %s118 = sadd.s32 %s117, 1
      %s119 = scalar_select %p116, %s117, %s118
      %p122 = pneg %p116
      %p123 = scmp.eq.s32.totalorder %s18, 1
      %p124 = por %p122, %p123
      %p125 = scmp.ne.s32.totalorder %s117, %s120
      %p126 = scmp.eq.s32.totalorder %s18, 0
      %p127 = por %p125, %p126
      %p128 = scmp.ne.s32.totalorder %s117, %s120
      %p129 = scmp.eq.s32.totalorder %s23, 1
      %p130 = por %p128, %p129
      %p131 = scmp.ne.s32.totalorder %s120, %s121
      %p132 = scmp.eq.s32.totalorder %s23, 0
      %p133 = por %p131, %p132
      %p134 = scmp.ne.s32.totalorder %s120, %s121
      %p135 = scmp.eq.s32.totalorder %s24, 1
      %p136 = por %p134, %p135
      %p138 = scmp.ne.s32.totalorder %s121, %s137
      %p139 = scmp.eq.s32.totalorder %s24, 0
      %p140 = por %p138, %p139
      %p141 = scmp.le.s32.totalorder 1, %s18
      %p142 = scmp.lt.s32.totalorder %s18, 3
      %p143 = pnand %p141, %p142
      %p144 = pneg %p143
      // Predicated region
      $region9: #{tpu_custom_call.1} parent=5 // pred_check
        _
      $region10: #{tpu_custom_call.1} parent=5 // pred_check_branch
        %146 = sbr.rel (%p143) target = $region12
      $region11: #{tpu_custom_call.1} parent=5 // pred_region
        %s147 = ssub.s32 %s18, 1
        // Predicated region
        $region13: #{tpu_custom_call.1} parent=11 // pred_check
          %p148 = pneg %p65
        $region14: #{tpu_custom_call.1} parent=11 // pred_check_branch
          %150 = sbr.rel (%p148) target = $region16
        $region15: #{tpu_custom_call.1} parent=11 // pred_region
          %s152 = ssub.s32 64, 64
          %153 = vsyncadd [#allocation7], %s152
          %s155 = sshll.u32 [#allocation6], 4
          %s156 = int_to_ptr.vmem [resolvable:$true] %s155
          %158 = dma.hbm_to_vmem [thread:$0]  %s1, 64, %s156, [#allocation7]
        $region16: #{tpu_custom_call.1} parent=11 // pred_fallthru
          _
        // Predicated region
        $region17: #{tpu_custom_call.1} parent=11 // pred_check
          %p159 = pneg %p86
        $region18: #{tpu_custom_call.1} parent=11 // pred_check_branch
          %161 = sbr.rel (%p159) target = $region20
        $region19: #{tpu_custom_call.1} parent=11 // pred_region
          %s163 = ssub.s32 128, 128
          %164 = vsyncadd [#allocation7], %s163
          %s166 = sshll.u32 [#allocation8], 4
          %s167 = int_to_ptr.vmem [resolvable:$true] %s166
          %169 = dma.hbm_to_vmem [thread:$0]  %s2, 128, %s167, [#allocation7]
        $region20: #{tpu_custom_call.1} parent=11 // pred_fallthru
          _
        // Predicated region
        $region21: #{tpu_custom_call.1} parent=11 // pred_check
          %p170 = pneg %p107
        $region22: #{tpu_custom_call.1} parent=11 // pred_check_branch
          %172 = sbr.rel (%p170) target = $region24
        $region23: #{tpu_custom_call.1} parent=11 // pred_region
          %s174 = ssub.s32 64, 64
          %175 = vsyncadd [#allocation10], %s174
          %s177 = sshll.u32 [#allocation9], 4
          %s178 = int_to_ptr.vmem [resolvable:$true] %s177
          %180 = dma.hbm_to_vmem [thread:$0]  %s3, 64, %s178, [#allocation10]
        $region24: #{tpu_custom_call.1} parent=11 // pred_fallthru
          _
      $region12: #{tpu_custom_call.1} parent=5 // pred_fallthru
        _
      %p181 = scmp.lt.s32.totalorder %s18, 2
      // Predicated region
      $region25: #{tpu_custom_call.1} parent=5 // pred_check
        %p182 = pneg %p181
      $region26: #{tpu_custom_call.1} parent=5 // pred_check_branch
        %184 = sbr.rel (%p182) target = $region28
      $region27: #{tpu_custom_call.1} parent=5 // pred_region
        // Predicated region
        $region29: #{tpu_custom_call.1} parent=27 // pred_check
          %p185 = pneg %p38
        $region30: #{tpu_custom_call.1} parent=27 // pred_check_branch
          %187 = sbr.rel (%p185) target = $region32
        $region31: #{tpu_custom_call.1} parent=27 // pred_region
          %s188 = sand.u32 %s28, 1
          %s189 = scalar_lea.sflag [#allocation4], %s188
          %s190 = sand.u32 %s28, 1
          %s191 = smul.addr %s190, 8
          %s192 = scalar_lea.vmem [#allocation3], %s191
          %s194 = ssub.s32 128, 128
          %195 = vsyncadd %s189, %s194
          %s196 = smul.addr %s18, 2
          %s197 = smul.addr %s196, 64
          %s198 = scalar_lea.hbm %s0, %s197
          %s200 = sshll.u32 %s192, 4
          %s201 = int_to_ptr.vmem [resolvable:$true] %s200
          %203 = dma.hbm_to_vmem [thread:$0]  %s198, 128, %s201, %s189
        $region32: #{tpu_custom_call.1} parent=27 // pred_fallthru
          _
      $region28: #{tpu_custom_call.1} parent=5 // pred_fallthru
        _
      %p204 = scmp.le.s32.totalorder 1, %s18
      %p205 = scmp.lt.s32.totalorder %s18, 3
      %p206 = pnand %p204, %p205
      %p207 = pneg %p206
      // Predicated region
      $region33: #{tpu_custom_call.1} parent=5 // pred_check
        _
      $region34: #{tpu_custom_call.1} parent=5 // pred_check_branch
        %209 = sbr.rel (%p206) target = $region36
      $region35: #{tpu_custom_call.1} parent=5 // pred_region
        %s210 = ssub.s32 %s18, 1
        %s211 = sand.u32 %s31, 1
        %s212 = scalar_lea.sflag [#allocation4], %s211
        %s213 = sand.u32 %s31, 1
        %s214 = smul.addr %s213, 8
        %s215 = scalar_lea.vmem [#allocation3], %s214
        // Predicated region
        $region37: #{tpu_custom_call.1} parent=35 // pred_check
          %p216 = pneg %p44
        $region38: #{tpu_custom_call.1} parent=35 // pred_check_branch
          %218 = sbr.rel (%p216) target = $region40
        $region39: #{tpu_custom_call.1} parent=35 // pred_region
          %219 = dma.done %s212, 128
        $region40: #{tpu_custom_call.1} parent=35 // pred_fallthru
          _
        // Predicated region
        $region41: #{tpu_custom_call.1} parent=35 // pred_check
          %p220 = pneg %p65
        $region42: #{tpu_custom_call.1} parent=35 // pred_check_branch
          %222 = sbr.rel (%p220) target = $region44
        $region43: #{tpu_custom_call.1} parent=35 // pred_region
          %223 = dma.done [#allocation7], 64
        $region44: #{tpu_custom_call.1} parent=35 // pred_fallthru
          _
        // Predicated region
        $region45: #{tpu_custom_call.1} parent=35 // pred_check
          %p224 = pneg %p86
        $region46: #{tpu_custom_call.1} parent=35 // pred_check_branch
          %226 = sbr.rel (%p224) target = $region48
        $region47: #{tpu_custom_call.1} parent=35 // pred_region
          %227 = dma.done [#allocation7], 128
        $region48: #{tpu_custom_call.1} parent=35 // pred_fallthru
          _
        // Predicated region
        $region49: #{tpu_custom_call.1} parent=35 // pred_check
          %p228 = pneg %p107
        $region50: #{tpu_custom_call.1} parent=35 // pred_check_branch
          %230 = sbr.rel (%p228) target = $region52
        $region51: #{tpu_custom_call.1} parent=35 // pred_region
          %231 = dma.done [#allocation10], 64
        $region52: #{tpu_custom_call.1} parent=35 // pred_fallthru
          _
        %s232 = sand.u32 %s31, 1
        %s233 = scalar_lea.sflag [#allocation4], %s232
        %s234 = sand.u32 %s31, 1
        %s235 = smul.addr %s234, 8
        %s236 = scalar_lea.vmem [#allocation3], %s235
        %p237 = pneg %p44
        %p238 = pneg %p41
        %p239 = pneg %p65
        %p240 = pneg %p62
        %p241 = pneg %p86
        %p242 = pneg %p83
        %p243 = pneg %p107
        %p244 = pneg %p104
        %p245 = pneg %p133
        %p246 = pneg %p130
        %s247 = sand.u32 %s120, 1
        %s248 = scalar_lea.sflag [#allocation5], %s247
        %s249 = sand.u32 %s120, 1
        %s250 = smul.addr %s249, 16
        %s251 = scalar_lea.vmem [#allocation11], %s250
        %v253 = vld [vmem:[#allocation9] ss:$2 sm:$0x3]
        %s254 = scalar_lea.vmem [#allocation9], 1
        %v255 = vld [vmem:[%s254] ss:$2 sm:$0x3]
        %v256 = vld [vmem:[#allocation6] sm:$0xf]
        %v257 = vld [vmem:[#allocation8] sm:$0xff]
        %vm258 = vcmp.ge.s32.totalorder %v253, 1
        %vm259 = vcmp.ge.s32.totalorder %v255, 1
        %vm260 = vmand %vm258, %vm259
        %vm261 = vcmp.lt.s32.totalorder %v255, 15
        %vm262 = vmand %vm258, %vm261
        %vm263 = vcmp.lt.s32.totalorder %v253, 15
        %vm264 = vmand %vm263, %vm259
        %vm265 = vmand %vm263, %vm261
        %v266 = vld [vmem:[%s215] sm:$0xff]
        %v268 = vcombine.high %v266, %v266
        %270 = vrot.lane.b32.xlu0 %v266, 17
        %v271 = vpop.permute.xlu0 %270
        %272 = vrot.lane.b32.xlu0 %v268, 17
        %v273 = vpop.permute.xlu0 %272
        %v274 = vlaneseq
        %v275 = vand.u32 %v274, 127
        %vm276 = vcmp.lt.s32.totalorder %v275, 17
        %v277 = vsel %vm276, %v271, %v273
        %v278 = vsel %vm276, %v273, %v271
        %v279 = vsel %vm260, 1, 0
        %v280 = vlaneseq
        %v281 = vshrl.u32 %v280, 7
        %v282 = vsub.s32 0, %v281
        %v283 = vrot.slane %v279, %v282
        %v284 = vlaneseq
        %v285 = vshrl.u32 %v284, 7
        %v286 = vsub.s32 1, %v285
        %v287 = vrot.slane %v279, %v286
        %vm288 = vcmp.eq.s32.totalorder %v283, 1
        %vm289 = vcmp.eq.s32.totalorder %v287, 1
        %v290 = vsel %vm288, %v278, 0.0
        %v291 = vsel %vm289, %v277, 0.0
        %292 = vst [vmem:[#allocation2] sm:$0xf] %v290
        %293 = vst [vmem:[#allocation2 + $0x8] sm:$0xf] %v291
        %294 = vrot.lane.b32.xlu0 %v266, 16
        %v295 = vpop.permute.xlu0 %294
        %296 = vrot.lane.b32.xlu0 %v268, 16
        %v297 = vpop.permute.xlu0 %296
        %vm298 = vcmp.lt.s32.totalorder %v275, 16
        %v299 = vsel %vm298, %v295, %v297
        %v300 = vsel %vm298, %v297, %v295
        %v301 = vsel %vm258, 1, 0
        %v302 = vlaneseq
        %v303 = vshrl.u32 %v302, 7
        %v304 = vsub.s32 0, %v303
        %v305 = vrot.slane %v301, %v304
        %v306 = vlaneseq
        %v307 = vshrl.u32 %v306, 7
        %v308 = vsub.s32 1, %v307
        %v309 = vrot.slane %v301, %v308
        %vm310 = vcmp.eq.s32.totalorder %v305, 1
        %vm311 = vcmp.eq.s32.totalorder %v309, 1
        %v312 = vsel %vm310, %v300, 0.0
        %v313 = vsel %vm311, %v299, 0.0
        %v316 = vrot.slane %v312, 4
        %v317 = vrot.slane %v313, 4
        %320 = vst [vmem:[#allocation2] sm:$0xf0] %v316
        %321 = vst [vmem:[#allocation2 + $0x8] sm:$0xf0] %v317
        %322 = vrot.lane.b32.xlu0 %v266, 15
        %v323 = vpop.permute.xlu0 %322
        %324 = vrot.lane.b32.xlu0 %v268, 15
        %v325 = vpop.permute.xlu0 %324
        %vm326 = vcmp.lt.s32.totalorder %v275, 15
        %v327 = vsel %vm326, %v323, %v325
        %v328 = vsel %vm326, %v325, %v323
        %v329 = vsel %vm262, 1, 0
        %v330 = vlaneseq
        %v331 = vshrl.u32 %v330, 7
        %v332 = vsub.s32 0, %v331
        %v333 = vrot.slane %v329, %v332
        %v334 = vlaneseq
        %v335 = vshrl.u32 %v334, 7
        %v336 = vsub.s32 1, %v335
        %v337 = vrot.slane %v329, %v336
        %vm338 = vcmp.eq.s32.totalorder %v333, 1
        %vm339 = vcmp.eq.s32.totalorder %v337, 1
        %v340 = vsel %vm338, %v328, 0.0
        %v341 = vsel %vm339, %v327, 0.0
        %342 = vst [vmem:[#allocation2 + $0x10] sm:$0xf] %v340
        %343 = vst [vmem:[#allocation2 + $0x18] sm:$0xf] %v341
        %344 = vrot.lane.b32.xlu0 %v266, 1
        %v345 = vpop.permute.xlu0 %344
        %346 = vrot.lane.b32.xlu0 %v268, 1
        %v347 = vpop.permute.xlu0 %346
        %vm348 = vcmp.lt.s32.totalorder %v275, 1
        %v349 = vsel %vm348, %v345, %v347
        %v350 = vsel %vm348, %v347, %v345
        %v351 = vsel %vm259, 1, 0
        %v352 = vlaneseq
        %v353 = vshrl.u32 %v352, 7
        %v354 = vsub.s32 0, %v353
        %v355 = vrot.slane %v351, %v354
        %v356 = vlaneseq
        %v357 = vshrl.u32 %v356, 7
        %v358 = vsub.s32 1, %v357
        %v359 = vrot.slane %v351, %v358
        %vm360 = vcmp.eq.s32.totalorder %v355, 1
        %vm361 = vcmp.eq.s32.totalorder %v359, 1
        %v362 = vsel %vm360, %v350, 0.0
        %v363 = vsel %vm361, %v349, 0.0
        %v366 = vrot.slane %v362, 4
        %v367 = vrot.slane %v363, 4
        %370 = vst [vmem:[#allocation2 + $0x10] sm:$0xf0] %v366
        %371 = vst [vmem:[#allocation2 + $0x18] sm:$0xf0] %v367
        %372 = vst [vmem:[#allocation2 + $0x20] sm:$0xf] %v266
        %373 = vst [vmem:[#allocation2 + $0x28] sm:$0xf] %v268
        %374 = vrot.lane.b32.xlu0 %v266, 127
        %v375 = vpop.permute.xlu0 %374
        %376 = vrot.lane.b32.xlu0 %v268, 127
        %v377 = vpop.permute.xlu0 %376
        %vm378 = vcmp.lt.s32.totalorder %v275, 127
        %v379 = vsel %vm378, %v375, %v377
        %v380 = vsel %vm378, %v377, %v375
        %v381 = vsel %vm261, 1, 0
        %v382 = vlaneseq
        %v383 = vshrl.u32 %v382, 7
        %v384 = vsub.s32 0, %v383
        %v385 = vrot.slane %v381, %v384
        %v386 = vlaneseq
        %v387 = vshrl.u32 %v386, 7
        %v388 = vsub.s32 1, %v387
        %v389 = vrot.slane %v381, %v388
        %vm390 = vcmp.eq.s32.totalorder %v385, 1
        %vm391 = vcmp.eq.s32.totalorder %v389, 1
        %v392 = vsel %vm390, %v379, 0.0
        %v393 = vsel %vm391, %v380, 0.0
        %v396 = vrot.slane %v392, 4
        %v397 = vrot.slane %v393, 4
        %400 = vst [vmem:[#allocation2 + $0x20] sm:$0xf0] %v396
        %401 = vst [vmem:[#allocation2 + $0x28] sm:$0xf0] %v397
        %402 = vrot.lane.b32.xlu0 %v266, 113
        %v403 = vpop.permute.xlu0 %402
        %404 = vrot.lane.b32.xlu0 %v268, 113
        %v405 = vpop.permute.xlu0 %404
        %vm406 = vcmp.lt.s32.totalorder %v275, 113
        %v407 = vsel %vm406, %v403, %v405
        %v408 = vsel %vm406, %v405, %v403
        %v409 = vsel %vm264, 1, 0
        %v410 = vlaneseq
        %v411 = vshrl.u32 %v410, 7
        %v412 = vsub.s32 0, %v411
        %v413 = vrot.slane %v409, %v412
        %v414 = vlaneseq
        %v415 = vshrl.u32 %v414, 7
        %v416 = vsub.s32 1, %v415
        %v417 = vrot.slane %v409, %v416
        %vm418 = vcmp.eq.s32.totalorder %v413, 1
        %vm419 = vcmp.eq.s32.totalorder %v417, 1
        %v420 = vsel %vm418, %v407, 0.0
        %v421 = vsel %vm419, %v408, 0.0
        %422 = vst [vmem:[#allocation2 + $0x30] sm:$0xf] %v420
        %423 = vst [vmem:[#allocation2 + $0x38] sm:$0xf] %v421
        %424 = vrot.lane.b32.xlu0 %v266, 112
        %v425 = vpop.permute.xlu0 %424
        %426 = vrot.lane.b32.xlu0 %v268, 112
        %v427 = vpop.permute.xlu0 %426
        %vm428 = vcmp.lt.s32.totalorder %v275, 112
        %v429 = vsel %vm428, %v425, %v427
        %v430 = vsel %vm428, %v427, %v425
        %v431 = vsel %vm263, 1, 0
        %v432 = vlaneseq
        %v433 = vshrl.u32 %v432, 7
        %v434 = vsub.s32 0, %v433
        %v435 = vrot.slane %v431, %v434
        %v436 = vlaneseq
        %v437 = vshrl.u32 %v436, 7
        %v438 = vsub.s32 1, %v437
        %v439 = vrot.slane %v431, %v438
        %vm440 = vcmp.eq.s32.totalorder %v435, 1
        %vm441 = vcmp.eq.s32.totalorder %v439, 1
        %v442 = vsel %vm440, %v429, 0.0
        %v443 = vsel %vm441, %v430, 0.0
        %v446 = vrot.slane %v442, 4
        %v447 = vrot.slane %v443, 4
        %450 = vst [vmem:[#allocation2 + $0x30] sm:$0xf0] %v446
        %451 = vst [vmem:[#allocation2 + $0x38] sm:$0xf0] %v447
        %452 = vrot.lane.b32.xlu0 %v266, 111
        %v453 = vpop.permute.xlu0 %452
        %454 = vrot.lane.b32.xlu0 %v268, 111
        %v455 = vpop.permute.xlu0 %454
        %vm456 = vcmp.lt.s32.totalorder %v275, 111
        %v457 = vsel %vm456, %v453, %v455
        %v458 = vsel %vm456, %v455, %v453
        %v459 = vsel %vm265, 1, 0
        %v460 = vlaneseq
        %v461 = vshrl.u32 %v460, 7
        %v462 = vsub.s32 0, %v461
        %v463 = vrot.slane %v459, %v462
        %v464 = vlaneseq
        %v465 = vshrl.u32 %v464, 7
        %v466 = vsub.s32 1, %v465
        %v467 = vrot.slane %v459, %v466
        %vm468 = vcmp.eq.s32.totalorder %v463, 1
        %vm469 = vcmp.eq.s32.totalorder %v467, 1
        %v470 = vsel %vm468, %v457, 0.0
        %v471 = vsel %vm469, %v458, 0.0
        %472 = vst [vmem:[#allocation2 + $0x40] sm:$0xf] %v470
        %473 = vst [vmem:[#allocation2 + $0x48] sm:$0xf] %v471
        %v474 = vld [vmem:[#allocation2] sm:$0xff]
        %v475 = vld [vmem:[#allocation2 + $0x8] sm:$0xff]
        %v476 = vld [vmem:[#allocation2 + $0x10] sm:$0xff]
        %v477 = vld [vmem:[#allocation2 + $0x18] sm:$0xff]
        %v478 = vld [vmem:[#allocation2 + $0x20] sm:$0xff]
        %v479 = vld [vmem:[#allocation2 + $0x28] sm:$0xff]
        %v480 = vld [vmem:[#allocation2 + $0x30] sm:$0xff]
        %v481 = vld [vmem:[#allocation2 + $0x38] sm:$0xff]
        %v482 = vld [vmem:[#allocation2 + $0x40] sm:$0xf]
        %v483 = vld [vmem:[#allocation2 + $0x48] sm:$0xf]
        %v484 = vpack.c.bf16 %v476, %v474
        %v485 = vpack.c.bf16 %v477, %v475
        %v486 = vpack.c.bf16 %v480, %v478
        %v487 = vpack.c.bf16 %v481, %v479
        %v488 = vpack.c.bf16 %v482, %v482
        %v489 = vpack.c.bf16 %v483, %v483
        %491 = vset.pattern.permute.xlu0 0
        %492 = vperm.xlu0 %491, %v257
        %v493 = vpop.permute.xlu0 %492
        %vm495 = vcmask 293888
        %v497 = vsel %vm495, %v256, 0
        %vm499 = vcmask 1041408
        %v501 = vsel %vm499, %v488, 0
        %v504 = vsel %vm499, %v489, 0
        %506 = vmatprep.subr.bf16.mxu0 %v485
        %507 = vmatpush1.bf16.msra.mxu0 %v484
        %508 = vmatprep.subr.bf16.mxu0 %v487
        %509 = vmatpush1.bf16.msra.mxu0 %v486
        %510 = vmatprep.subr.bf16.mxu0 %v504
        %511 = vmatpush1.bf16.msra.mxu0 %v501
        %512 = vmatprep.subr.bf16.mxu0 0
        %513 = vmatpush1.bf16.msra.mxu0 0
        %514 = vmatprep.subr.bf16.mxu0 0
        %515 = vmatpush1.bf16.msra.mxu0 0
        %516 = vmatprep.subr.bf16.mxu0 0
        %517 = vmatpush1.bf16.msra.mxu0 0
        %518 = vmatprep.subr.bf16.mxu0 0
        %519 = vmatpush1.bf16.msra.mxu0 0
        %520 = vmatprep.subr.bf16.mxu0 0
        %521 = vmatpush1.bf16.msra.mxu0 0
        %522 = vmatprep.subr.bf16.mxu0 0
        %523 = vmatpush1.bf16.msra.mxu0 0
        %524 = vmatprep.subr.bf16.mxu0 0
        %525 = vmatpush1.bf16.msra.mxu0 0
        %526 = vmatprep.subr.bf16.mxu0 0
        %527 = vmatpush1.bf16.msra.mxu0 0
        %528 = vmatprep.subr.bf16.mxu0 0
        %529 = vmatpush1.bf16.msra.mxu0 0
        %530 = vmatprep.subr.bf16.mxu0 0
        %531 = vmatpush1.bf16.msra.mxu0 0
        %532 = vmatprep.subr.bf16.mxu0 0
        %533 = vmatpush1.bf16.msra.mxu0 0
        %534 = vmatprep.subr.bf16.mxu0 0
        %535 = vmatpush1.bf16.msra.mxu0 0
        %536 = vmatprep.subr.bf16.mxu0 0
        %537 = vmatpush1.bf16.msra.mxu0 0
        %538 = vmatprep.mubr.bf16.mxu0 0
        %539 = vmatmul.mubr.bf16.gmra.mrb[0].mxu0 %v497
        %v540 = vpop.f32.mrb[0].mxu0
        %v541 = vadd.f32 %v493, %v540
        %v542 = vpop.f32.mrb[0].mxu0
        %v543 = vadd.f32 %v493, %v542
        %v544 = vpop.f32.mrb[0].mxu0
        %v545 = vpop.f32.mrb[0].mxu0
        %546 = vdwg.mxu0
        %v547 = vmax.f32 %v541, 0.0
        %v548 = vmax.f32 %v543, 0.0
        %549 = vst [vmem:[%s251] sm:$0xff] %v547
        %550 = vst [vmem:[%s251 + $0x8] sm:$0xff] %v548
        %s551 = sand.u32 %s120, 1
        %s552 = scalar_lea.sflag [#allocation5], %s551
        %s553 = sand.u32 %s120, 1
        %s554 = smul.addr %s553, 16
        %s555 = scalar_lea.vmem [#allocation11], %s554
        // Predicated region
        $region53: #{tpu_custom_call.1} parent=35 // pred_check
          %p556 = pneg %p130
        $region54: #{tpu_custom_call.1} parent=35 // pred_check_branch
          %558 = sbr.rel (%p556) target = $region56
        $region55: #{tpu_custom_call.1} parent=35 // pred_region
          %s560 = ssub.s32 256, 256
          %561 = vsyncadd %s552, %s560
          %s562 = smul.addr %s23, 2
          %s563 = smul.addr %s562, 128
          %s564 = scalar_lea.hbm %s4, %s563
          %s566 = sshll.u32 %s555, 4
          %s567 = int_to_ptr.vmem [resolvable:$true] %s566
          %569 = dma.vmem_to_hbm [thread:$0]  %s567, 256, %s564, %s552
        $region56: #{tpu_custom_call.1} parent=35 // pred_fallthru
          _
      $region36: #{tpu_custom_call.1} parent=5 // pred_fallthru
        _
      %p570 = scmp.le.s32.totalorder 2, %s18
      // Predicated region
      $region57: #{tpu_custom_call.1} parent=5 // pred_check
        %p571 = pneg %p570
      $region58: #{tpu_custom_call.1} parent=5 // pred_check_branch
        %573 = sbr.rel (%p571) target = $region60
      $region59: #{tpu_custom_call.1} parent=5 // pred_region
        %s574 = ssub.s32 %s18, 2
        // Predicated region
        $region61: #{tpu_custom_call.1} parent=59 // pred_check
          %p575 = pneg %p136
        $region62: #{tpu_custom_call.1} parent=59 // pred_check_branch
          %577 = sbr.rel (%p575) target = $region64
        $region63: #{tpu_custom_call.1} parent=59 // pred_region
          %s578 = sand.u32 %s121, 1
          %s579 = scalar_lea.sflag [#allocation5], %s578
          %s580 = sand.u32 %s121, 1
          %s581 = smul.addr %s580, 16
          %s582 = scalar_lea.vmem [#allocation11], %s581
          %583 = dma.done %s579, 256
        $region64: #{tpu_custom_call.1} parent=59 // pred_fallthru
          _
      $region60: #{tpu_custom_call.1} parent=5 // pred_fallthru
        _
    $region6: #{tpu_custom_call.1} parent=1 // loop_footer
      %s22 = sadd.s32 1, %s18
    $region7: #{tpu_custom_call.1} parent=1 // loop_footer_branch
      %17 = sbr.rel target = $region3
    $region8: #{tpu_custom_call.1} parent=1 // loop_exit
      _
    %584 = vsyncpa [#allocation4], 1
    %s585 = scalar_lea.sflag [#allocation4], 1
    %586 = vsyncpa %s585, 1
    %587 = vsyncpa [#allocation7], 1
    %588 = vsyncpa [#allocation10], 1
    %589 = vsyncpa [#allocation5], 1
    %s590 = scalar_lea.sflag [#allocation5], 1
    %591 = vsyncpa %s590, 1

</llo_original>
